<compile_context>
chip_gen: v7x
topology: tpu7x:2x2x1
jax: 0.10.0
libtpu: 0.0.40
codegen_flags: <defaults>
</compile_context>

<pallas_src>
import functools

import jax
import jax.numpy as jnp
from jax.experimental import pallas as pl
from jax.experimental.pallas import tpu as pltpu


def _round_up(x, m):
    return (x + m - 1) // m * m


def _vmem_limit_bytes():
    # 3/4 of physical VMEM of whatever generation we are on:
    # v5e/v6e (128 MiB) -> 96 MiB, v7x (64 MiB per TC) -> 48 MiB.
    try:
        cap = pltpu.get_tpu_info().vmem_capacity_bytes
    except Exception:  # conservative fallback if the query is unavailable
        cap = 64 * 1024 * 1024
    return int(cap * 3 // 4)


def _patch_embed_kernel(x_ref, w_ref, b_ref, o_ref):
    # x_ref: (TM, K_pad)    streamed activation tile (bf16 by default)
    # w_ref: (K_pad, D_pad) resident weight (block index fixed at (0, 0))
    # b_ref: (1, D_pad)     resident bias, f32 epilogue
    # o_ref: (TM, D_pad)    output tile
    acc = jnp.dot(x_ref[...], w_ref[...], preferred_element_type=jnp.float32)
    o_ref[...] = (acc + b_ref[...]).astype(o_ref.dtype)


@functools.partial(
    jax.jit, static_argnames=("patch_size", "tm", "compute_dtype", "out_dtype"))
def patch_embedding(x, weight, bias, patch_size, *, tm=512,
                    compute_dtype=jnp.bfloat16, out_dtype=None):
    """x: (B, C, H, W) NCHW. weight: (dim, C, pH, pW). bias: (dim,).

    Returns (B, num_patches, dim), identical semantics to
    nn.Conv2d(C, dim, kernel_size=patch_size, stride=patch_size)
    followed by .flatten(2).transpose(1, 2).
    """
    pH, pW = patch_size
    B, C, H, W = x.shape
    dim = weight.shape[0]
    Hp, Wp = H // pH, W // pW
    num_patches = Hp * Wp
    M = B * num_patches
    K = C * pH * pW

    if out_dtype is None:
        out_dtype = x.dtype
    if compute_dtype is None:
        compute_dtype = x.dtype
    cbytes = jnp.dtype(compute_dtype).itemsize

    # ---- tile / padding sizing --------------------------------------------
    sublane = 16 if cbytes == 2 else (32 if cbytes == 1 else 8)
    K_pad = _round_up(K, 128)
    # Prefer 256-aligned D (full v6e/v7x MXU tiles) when the extra padding
    # past the mandatory 128 alignment is a small fraction of dim.
    D_pad = _round_up(dim, 128)
    if D_pad % 256 != 0 and (_round_up(dim, 256) - dim) <= dim // 8:
        D_pad = _round_up(dim, 256)

    grid_m = pl.cdiv(M, tm)
    if grid_m < 2 and M > sublane:
        grid_m = 2                      # give the v7x megacore two tiles to split
    TM = _round_up(pl.cdiv(M, grid_m), sublane)
    grid_m = pl.cdiv(M, TM)
    M_pad = grid_m * TM

    # ---- glue: patchify as ONE fused XLA copy (cast + transpose + pad) -----
    # Inner order (c, kh, kw) matches the Conv2d weight flattening.
    xp = x.astype(compute_dtype).reshape(B, C, Hp, pH, Wp, pW)
    xp = jnp.transpose(xp, (0, 2, 4, 1, 3, 5))          # (B, Hp, Wp, C, pH, pW)
    xp = xp.reshape(M, K)
    if M_pad != M or K_pad != K:                         # pad fuses into the copy
        xp = jnp.pad(xp, ((0, M_pad - M), (0, K_pad - K)))

    w2 = weight.astype(compute_dtype).reshape(dim, K).T  # (K, dim)
    if K_pad != K or D_pad != dim:
        w2 = jnp.pad(w2, ((0, K_pad - K), (0, D_pad - dim)))
    b2 = bias.astype(jnp.float32).reshape(1, dim)        # f32 epilogue
    if D_pad != dim:
        b2 = jnp.pad(b2, ((0, 0), (0, D_pad - dim)))

    # ---- block specs --------------------------------------------------------
    x_spec = pl.BlockSpec((TM, K_pad), lambda i: (i, 0))        # streamed
    resident_bytes = K_pad * D_pad * cbytes
    if resident_bytes > (2 << 20):
        # Large resident weight: block index never changes, so double-buffering
        # it only wastes VMEM (matters on the 64 MiB v7x part).
        w_spec = pl.BlockSpec((K_pad, D_pad), lambda i: (0, 0),
                              pipeline_mode=pl.Buffered(1))
        b_spec = pl.BlockSpec((1, D_pad), lambda i: (0, 0),
                              pipeline_mode=pl.Buffered(1))
    else:
        w_spec = pl.BlockSpec((K_pad, D_pad), lambda i: (0, 0))
        b_spec = pl.BlockSpec((1, D_pad), lambda i: (0, 0))
    o_spec = pl.BlockSpec((TM, D_pad), lambda i: (i, 0))

    cost = pl.CostEstimate(
        flops=2 * M_pad * K_pad * D_pad,
        transcendentals=0,
        bytes_accessed=(M_pad * K_pad * cbytes + K_pad * D_pad * cbytes
                        + D_pad * 4 + M_pad * D_pad * jnp.dtype(out_dtype).itemsize),
    )

    out = pl.pallas_call(
        _patch_embed_kernel,
        out_shape=jax.ShapeDtypeStruct((M_pad, D_pad), out_dtype),
        grid_spec=pltpu.PrefetchScalarGridSpec(
            num_scalar_prefetch=0,
            grid=(grid_m,),
            in_specs=[x_spec, w_spec, b_spec],
            out_specs=o_spec,
        ),
        compiler_params=pltpu.CompilerParams(
            dimension_semantics=("parallel",),   # independent M tiles; megacore
            vmem_limit_bytes=_vmem_limit_bytes(),
        ),
        cost_estimate=cost,
    )(xp, w2, b2)

    return out[:M, :dim].reshape(B, num_patches, dim)


if __name__ == "__main__":
    # Small shapes consistent with the module: input 16x16, patch 8x8,
    # in_channels=4, dim=32  ->  num_patches = (16//8)*(16//8) = 4.
    B, C, H, W = 2, 4, 16, 16
    pH = pW = 8
    dim = 32

    key = jax.random.PRNGKey(0)
    kx, kw, kb = jax.random.split(key, 3)
    x = jax.random.normal(kx, (B, C, H, W), dtype=jnp.float32)
    # deterministic synthetic Conv2d params (same shapes as nn.Conv2d(C, dim, 8, 8))
    weight = jax.random.normal(kw, (dim, C, pH, pW), dtype=jnp.float32) * 0.02
    bias = jax.random.normal(kb, (dim,), dtype=jnp.float32) * 0.02

    # default path: bf16 MXU inputs, f32 accumulate + f32 bias, f32 output
    out = patch_embedding(x, weight, bias, (pH, pW))
    out = jax.block_until_ready(out)
    assert out.shape == (B, (H // pH) * (W // pW), dim)

    # plain-JAX conv reference at highest precision
    ref = jax.lax.conv_general_dilated(
        x, weight, window_strides=(pH, pW), padding="VALID",
        dimension_numbers=("NCHW", "OIHW", "NCHW"),
        precision=jax.lax.Precision.HIGHEST)
    ref = ref + bias.reshape(1, dim, 1, 1)
    ref = ref.reshape(B, dim, -1).transpose(0, 2, 1)

    # bf16-input path: loose tolerance (input rounding only; accumulation is f32)
    assert jnp.allclose(out, ref, atol=2e-2, rtol=2e-2)

    # f32 MXU path: tighter tolerance
    out_f32 = patch_embedding(x, weight, bias, (pH, pW), compute_dtype=jnp.float32)
    out_f32 = jax.block_until_ready(out_f32)
    assert jnp.allclose(out_f32, ref, atol=2e-3, rtol=1e-3)

    print("KERNEL_OK")
</pallas_src>

<mosaic_0001>
module attributes {stable_mosaic.version = 11 : i64} {
  func.func @_patch_embed_kernel(%arg0: i32, %arg1: memref<16x256xbf16, #tpu.memory_space<vmem>>, %arg2: memref<256x128xbf16, #tpu.memory_space<vmem>>, %arg3: memref<1x128xf32, #tpu.memory_space<vmem>>, %arg4: memref<16x128xf32, #tpu.memory_space<vmem>>) attributes {dimension_semantics = [#tpu.dimension_semantics<parallel>], iteration_bounds = array<i64: 1>, scalar_prefetch = 0 : i64, scratch_operands = 0 : i64, tpu.core_type = #tpu.core_type<tc>, window_params = [{transform_indices = @transform_0, window_bounds = array<i64: 16, 256>}, {pipeline_mode = #tpu.pipeline_mode<synchronous>, transform_indices = @transform_1, window_bounds = array<i64: 256, 128>}, {pipeline_mode = #tpu.pipeline_mode<synchronous>, transform_indices = @transform_2, window_bounds = array<i64: 1, 128>}, {transform_indices = @transform_3, window_bounds = array<i64: 16, 128>}]} {
    %c0 = arith.constant 0 : index
    %c0_0 = arith.constant 0 : index
    %0 = vector.load %arg1[%c0, %c0_0] : memref<16x256xbf16, #tpu.memory_space<vmem>>, vector<16x256xbf16>
    %c0_1 = arith.constant 0 : index
    %c0_2 = arith.constant 0 : index
    %1 = vector.load %arg2[%c0_1, %c0_2] : memref<256x128xbf16, #tpu.memory_space<vmem>>, vector<256x128xbf16>
    %cst = arith.constant dense<0.000000e+00> : vector<16x128xf32>
    %2 = tpu.matmul %0, %1, %cst {dimension_numbers = #tpu.dot_dimension_numbers<[1], [0], [0], [1], [0, 0, 1, 1], [], []>} : vector<16x256xbf16>, vector<256x128xbf16>, vector<16x128xf32> -> vector<16x128xf32>
    %c0_3 = arith.constant 0 : index
    %c0_4 = arith.constant 0 : index
    %3 = vector.load %arg3[%c0_3, %c0_4] : memref<1x128xf32, #tpu.memory_space<vmem>>, vector<1x128xf32>
    %4 = vector.broadcast %3 : vector<1x128xf32> to vector<16x128xf32>
    %5 = arith.addf %2, %4 : vector<16x128xf32>
    %c0_5 = arith.constant 0 : index
    %c0_6 = arith.constant 0 : index
    %6 = vector.load %arg4[%c0_5, %c0_6] : memref<16x128xf32, #tpu.memory_space<vmem>>, vector<16x128xf32>
    tpu.vector_store %arg4[%c0_5, %c0_6], %5 {strides = array<i32>} : memref<16x128xf32, #tpu.memory_space<vmem>>, vector<16x128xf32>,
    return
  }
  func.func @transform_0(%arg0: i32) -> (i32, i32) {
    %c0_i32 = arith.constant 0 : i32
    %c0_i32_0 = arith.constant 0 : i32
    return %arg0, %c0_i32 : i32, i32
  }
  func.func @transform_1(%arg0: i32) -> (i32, i32) {
    %c0_i32 = arith.constant 0 : i32
    %c0_i32_0 = arith.constant 0 : i32
    %c0_i32_1 = arith.constant 0 : i32
    return %c0_i32, %c0_i32_0 : i32, i32
  }
  func.func @transform_2(%arg0: i32) -> (i32, i32) {
    %c0_i32 = arith.constant 0 : i32
    %c0_i32_0 = arith.constant 0 : i32
    %c0_i32_1 = arith.constant 0 : i32
    return %c0_i32, %c0_i32_0 : i32, i32
  }
  func.func @transform_3(%arg0: i32) -> (i32, i32) {
    %c0_i32 = arith.constant 0 : i32
    %c0_i32_0 = arith.constant 0 : i32
    return %arg0, %c0_i32 : i32, i32
  }
}

</mosaic_0001>

<llo_original>
// kernel: patch_embedding.1
$region0: #{patch_embedding.1}
  #allocation0 [shape = 'u32[]', space=smem, size = 0x4, offset = 0x4, fixed_abs, tag = 'smem constant byte address 0x4 - core index']
  #allocation1 [shape = 'u32[144,128]{1,0:T(1,128)}', space=vmem, size = 0x12000, scoped, tag = 'internal scratch']
  %s0 = inlined_call_operand.vmem [shape: bf16[16,256], index: 0, kind: input, shape index: {}]
  %s1 = inlined_call_operand.vmem [shape: bf16[256,128], index: 1, kind: input, shape index: {}]
  %s2 = inlined_call_operand.vmem [shape: f32[1,128], index: 2, kind: input, shape index: {}]
  %s3 = inlined_call_operand.vmem [shape: f32[16,128], index: 3, kind: output, shape index: {}]
  %s4 = sld [smem:[#allocation0]]
  $region22: #{patch_embedding.1} parent=0
    _
  %s6 = ssub.s32 1, %s4
  %s7 = scalar_select 0, %s6, %s4
  // Predicated region
  $region2: #{patch_embedding.1} parent=0 // pred_check
    _
  $region3: #{patch_embedding.1} parent=0 // pred_check_branch
    %9 = sbr.rel (0) target = $region5
  $region4: #{patch_embedding.1} parent=0 // pred_region
    _
  $region5: #{patch_embedding.1} parent=0 // pred_fallthru
    _
  // Predicated region
  $region6: #{patch_embedding.1} parent=0 // pred_check
    _
  $region7: #{patch_embedding.1} parent=0 // pred_check_branch
    %11 = sbr.rel (0) target = $region9
  $region8: #{patch_embedding.1} parent=0 // pred_region
    _
  $region9: #{patch_embedding.1} parent=0 // pred_fallthru
    _
  // Predicated region
  $region10: #{patch_embedding.1} parent=0 // pred_check
    _
  $region11: #{patch_embedding.1} parent=0 // pred_check_branch
    %13 = sbr.rel (0) target = $region13
  $region12: #{patch_embedding.1} parent=0 // pred_region
    _
  $region13: #{patch_embedding.1} parent=0 // pred_fallthru
    _
  %v15 = vld [vmem:[%s0] sm:$0xff]
  %v16 = vld [vmem:[%s0 + $0x8] sm:$0xff]
  %v17 = vld [vmem:[%s1] sm:$0xf]
  %v18 = vld [vmem:[%s1 + $0x4] sm:$0xf]
  %v19 = vld [vmem:[%s1 + $0x8] sm:$0xf]
  %v20 = vld [vmem:[%s1 + $0xc] sm:$0xf]
  %v21 = vld [vmem:[%s1 + $0x10] sm:$0xf]
  %v22 = vld [vmem:[%s1 + $0x14] sm:$0xf]
  %v23 = vld [vmem:[%s1 + $0x18] sm:$0xf]
  %v24 = vld [vmem:[%s1 + $0x1c] sm:$0xf]
  %v25 = vld [vmem:[%s1 + $0x20] sm:$0xf]
  %v26 = vld [vmem:[%s1 + $0x24] sm:$0xf]
  %v27 = vld [vmem:[%s1 + $0x28] sm:$0xf]
  %v28 = vld [vmem:[%s1 + $0x2c] sm:$0xf]
  %v29 = vld [vmem:[%s1 + $0x30] sm:$0xf]
  %v30 = vld [vmem:[%s1 + $0x34] sm:$0xf]
  %v31 = vld [vmem:[%s1 + $0x38] sm:$0xf]
  %v32 = vld [vmem:[%s1 + $0x3c] sm:$0xf]
  %v33 = vld [vmem:[%s1 + $0x40] sm:$0xf]
  %v34 = vld [vmem:[%s1 + $0x44] sm:$0xf]
  %v35 = vld [vmem:[%s1 + $0x48] sm:$0xf]
  %v36 = vld [vmem:[%s1 + $0x4c] sm:$0xf]
  %v37 = vld [vmem:[%s1 + $0x50] sm:$0xf]
  %v38 = vld [vmem:[%s1 + $0x54] sm:$0xf]
  %v39 = vld [vmem:[%s1 + $0x58] sm:$0xf]
  %v40 = vld [vmem:[%s1 + $0x5c] sm:$0xf]
  %v41 = vld [vmem:[%s1 + $0x60] sm:$0xf]
  %v42 = vld [vmem:[%s1 + $0x64] sm:$0xf]
  %v43 = vld [vmem:[%s1 + $0x68] sm:$0xf]
  %v44 = vld [vmem:[%s1 + $0x6c] sm:$0xf]
  %v45 = vld [vmem:[%s1 + $0x70] sm:$0xf]
  %v46 = vld [vmem:[%s1 + $0x74] sm:$0xf]
  %v47 = vld [vmem:[%s1 + $0x78] sm:$0xf]
  %v48 = vld [vmem:[%s1 + $0x7c] sm:$0xf]
  %v49 = vld [vmem:[%s2] sm:$0x1]
  %v51 = vlaneseq
  %v52 = vshrl.u32 %v51, 7
  %v53 = vsub.s32 0, %v52
  %v54 = vrot.slane %v49, %v53
  %v58 = vunpack.c.l.b16 %v15
  %v59 = vunpack.c.h.b16 %v15
  %v60 = vunpack.c.l.b16 %v16
  %v61 = vunpack.c.h.b16 %v16
  %v62 = vpack.c.b16 %v60, %v58
  %v63 = vpack.c.b16 %v61, %v59
  %v98 = vunpack.c.l.b16 %v17
  %v99 = vunpack.c.l.b16 %v18
  %v100 = vunpack.c.l.b16 %v19
  %v101 = vunpack.c.l.b16 %v20
  %v102 = vunpack.c.l.b16 %v21
  %v103 = vunpack.c.l.b16 %v22
  %v104 = vunpack.c.l.b16 %v23
  %v105 = vunpack.c.l.b16 %v24
  %v106 = vunpack.c.l.b16 %v25
  %v107 = vunpack.c.l.b16 %v26
  %v108 = vunpack.c.l.b16 %v27
  %v109 = vunpack.c.l.b16 %v28
  %v110 = vunpack.c.l.b16 %v29
  %v111 = vunpack.c.l.b16 %v30
  %v112 = vunpack.c.l.b16 %v31
  %v113 = vunpack.c.l.b16 %v32
  %v114 = vunpack.c.l.b16 %v33
  %v115 = vunpack.c.l.b16 %v34
  %v116 = vunpack.c.l.b16 %v35
  %v117 = vunpack.c.l.b16 %v36
  %v118 = vunpack.c.l.b16 %v37
  %v119 = vunpack.c.l.b16 %v38
  %v120 = vunpack.c.l.b16 %v39
  %v121 = vunpack.c.l.b16 %v40
  %v122 = vunpack.c.l.b16 %v41
  %v123 = vunpack.c.l.b16 %v42
  %v124 = vunpack.c.l.b16 %v43
  %v125 = vunpack.c.l.b16 %v44
  %v126 = vunpack.c.l.b16 %v45
  %v127 = vunpack.c.l.b16 %v46
  %v128 = vunpack.c.l.b16 %v47
  %v129 = vunpack.c.l.b16 %v48
  %v130 = vpack.c.b16 %v99, %v98
  %v131 = vpack.c.b16 %v101, %v100
  %v132 = vpack.c.b16 %v103, %v102
  %v133 = vpack.c.b16 %v105, %v104
  %v134 = vpack.c.b16 %v107, %v106
  %v135 = vpack.c.b16 %v109, %v108
  %v136 = vpack.c.b16 %v111, %v110
  %v137 = vpack.c.b16 %v113, %v112
  %v138 = vpack.c.b16 %v115, %v114
  %v139 = vpack.c.b16 %v117, %v116
  %v140 = vpack.c.b16 %v119, %v118
  %v141 = vpack.c.b16 %v121, %v120
  %v142 = vpack.c.b16 %v123, %v122
  %v143 = vpack.c.b16 %v125, %v124
  %v144 = vpack.c.b16 %v127, %v126
  %v145 = vpack.c.b16 %v129, %v128
  %162 = vmatprep.subr.bf16.mxu0 0
  %163 = vmatpush1.bf16.msra.mxu0 %v130
  %164 = vmatprep.subr.bf16.mxu0 0
  %165 = vmatpush1.bf16.msra.mxu0 %v131
  %166 = vmatprep.subr.bf16.mxu0 0
  %167 = vmatpush1.bf16.msra.mxu0 %v132
  %168 = vmatprep.subr.bf16.mxu0 0
  %169 = vmatpush1.bf16.msra.mxu0 %v133
  %170 = vmatprep.subr.bf16.mxu0 0
  %171 = vmatpush1.bf16.msra.mxu0 %v134
  %172 = vmatprep.subr.bf16.mxu0 0
  %173 = vmatpush1.bf16.msra.mxu0 %v135
  %174 = vmatprep.subr.bf16.mxu0 0
  %175 = vmatpush1.bf16.msra.mxu0 %v136
  %176 = vmatprep.subr.bf16.mxu0 0
  %177 = vmatpush1.bf16.msra.mxu0 %v137
  %178 = vmatprep.subr.bf16.mxu0 0
  %179 = vmatpush1.bf16.msra.mxu0 %v138
  %180 = vmatprep.subr.bf16.mxu0 0
  %181 = vmatpush1.bf16.msra.mxu0 %v139
  %182 = vmatprep.subr.bf16.mxu0 0
  %183 = vmatpush1.bf16.msra.mxu0 %v140
  %184 = vmatprep.subr.bf16.mxu0 0
  %185 = vmatpush1.bf16.msra.mxu0 %v141
  %186 = vmatprep.subr.bf16.mxu0 0
  %187 = vmatpush1.bf16.msra.mxu0 %v142
  %188 = vmatprep.subr.bf16.mxu0 0
  %189 = vmatpush1.bf16.msra.mxu0 %v143
  %190 = vmatprep.subr.bf16.mxu0 0
  %191 = vmatpush1.bf16.msra.mxu0 %v144
  %192 = vmatprep.subr.bf16.mxu0 0
  %193 = vmatpush1.bf16.msra.mxu0 %v145
  %194 = vmatprep.mubr.bf16.mxu0 %v63
  %195 = vmatmul.mubr.bf16.gmra.mrb[0].mxu0 %v62
  %v196 = vpop.f32.mrb[0].mxu0
  %v197 = vadd.f32 %v54, %v196
  %v198 = vpop.f32.mrb[0].mxu0
  %v199 = vpop.f32.mrb[0].mxu0
  %v200 = vadd.f32 %v54, %v199
  %v201 = vpop.f32.mrb[0].mxu0
  %202 = vdwg.mxu0
  %203 = vst [vmem:[%s3] sm:$0xff] %v197
  %204 = vst [vmem:[%s3 + $0x8] sm:$0xff] %v200
  // Predicated region
  $region14: #{patch_embedding.1} parent=0 // pred_check
    _
  $region15: #{patch_embedding.1} parent=0 // pred_check_branch
    %206 = sbr.rel (0) target = $region17
  $region16: #{patch_embedding.1} parent=0 // pred_region
    _
  $region17: #{patch_embedding.1} parent=0 // pred_fallthru
    _
  // Predicated region
  $region18: #{patch_embedding.1} parent=0 // pred_check
    _
  $region19: #{patch_embedding.1} parent=0 // pred_check_branch
    %208 = sbr.rel (0) target = $region21
  $region20: #{patch_embedding.1} parent=0 // pred_region
    _
  $region21: #{patch_embedding.1} parent=0 // pred_fallthru
    _

</llo_original>
